<compile_context>
chip_gen: v6e
topology: v6e:2x2x1
jax: 0.10.0
libtpu: 0.0.40
codegen_flags: <defaults>
</compile_context>

<pallas_src>
import functools

import jax
import jax.numpy as jnp
from jax import lax
from jax.experimental import pallas as pl
from jax.experimental.pallas import tpu as pltpu

EPS = 1e-8
QMAX = 127.0      # 2**(bits-1) - 1, bits = 8
QMIN = -128.0     # -2**(bits-1)
LANE = 128
_MIB = 1024 * 1024


def _round_up(n, m):
    return ((n + m - 1) // m) * m


def _tpu_generation():
    """Best-effort TPU generation (3..7) from the device kind string."""
    try:
        kind = jax.devices()[0].device_kind.lower()
    except Exception:
        return None
    for g in (7, 6, 5, 4, 3):
        if ("v%d" % g) in kind or ("tpu%d" % g) in kind:
            return g
    return None


def _vmem_capacity_bytes():
    try:
        return int(pltpu.get_tpu_info().vmem_capacity_bytes)
    except Exception:
        pass
    gen = _tpu_generation()
    if gen is None or gen >= 7:
        return 64 * _MIB        # v7x is 64 MiB/TC; be conservative when unknown
    if gen <= 3:
        return 16 * _MIB
    return 128 * _MIB           # v4 / v5e / v6e


# --------------------------------------------------------------------------- #
# In-kernel math helpers
# --------------------------------------------------------------------------- #
def _rms_norm_rows(x, d, d_pad, eps):
    """Row-wise mean-centered RMS norm (RMSNormFunction.forward) on a
    (rows, d_pad) f32 tile whose columns [d:d_pad) are zero padding."""
    col_mask = None
    if d != d_pad:
        col_mask = lax.broadcasted_iota(jnp.int32, x.shape, 1) < d
    inv_d = 1.0 / d
    mean = jnp.sum(x, axis=-1, keepdims=True) * inv_d          # pad cols are 0
    centered = x - mean
    sq = centered * centered
    if col_mask is not None:
        sq = jnp.where(col_mask, sq, 0.0)
    var = jnp.sum(sq, axis=-1, keepdims=True) * inv_d          # unbiased=False
    r = lax.rsqrt(jnp.maximum(var + eps, 1e-10))               # EUP rsqrt, not VALU div
    y = r * centered
    if col_mask is not None:
        y = jnp.where(col_mask, y, 0.0)                        # keep pad lanes at 0
    return jnp.where(jnp.isnan(y), 0.0, y)                     # torch nan_to_num


def _scale_scalars(amax):
    """activation_quant scale with the torch edge cases (amax == 0 / NaN -> 1.0)."""
    amax = amax.astype(jnp.float32)
    bad = jnp.logical_or(amax == 0.0, jnp.isnan(amax))
    scale = jnp.where(bad, jnp.float32(1.0), amax / QMAX)
    return scale, jnp.float32(1.0) / scale


def _scale_vec(amax):
    scale, inv_scale = _scale_scalars(amax)
    return jnp.stack([scale, inv_scale]).reshape(1, 2).astype(jnp.float32)


def _quantize(v, inv_scale, qdtype):
    # Integer-valued in [-128, 127]: exact in bf16 / int8, so the scalar scale is
    # deferred past the matmul (scale commutes with the contraction).
    return jnp.clip(jnp.round(v * inv_scale), QMIN, QMAX).astype(qdtype)


def _row_group_absmax(v, rows):
    """VPU-only partial max: fold sublane groups of 8, keep an (8, lanes) tile
    (avoids a full XLU reduce that would contend with MXU issue slots)."""
    cols = v.shape[-1]
    return jnp.max(v.reshape(rows // 8, 8, cols), axis=0)


# --------------------------------------------------------------------------- #
# Kernels
# --------------------------------------------------------------------------- #
def _norm_stats_kernel(x_ref, y_ref, amax_ref, *, d, d_pad, eps):
    """Pass 1: y = rms_norm(x) (stored bf16) and per-row-tile abs-max of y."""
    y = _rms_norm_rows(x_ref[...].astype(jnp.float32), d, d_pad, eps)
    y_ref[...] = y.astype(y_ref.dtype)
    # No matmul in this kernel, so a plain reduce to a scalar does not contend.
    amax_ref[...] = jnp.full(amax_ref.shape, jnp.max(jnp.abs(y)), dtype=amax_ref.dtype)


def _gate_up_kernel(scale_ref, y_ref, wg_ref, wu_ref, bg_ref, bu_ref,
                    p_ref, amax_ref, yq_ref, *, tm, m, m_pad, use_int8):
    """Pass 2: quant(y) @ sign(W_g)/sign(W_u) column tile, SiLU gate, p tile."""
    j = pl.program_id(1)

    @pl.when(j == 0)                        # yq cached across all column tiles of row i
    def _():
        yq_ref[...] = _quantize(y_ref[...].astype(jnp.float32),
                                scale_ref[0, 1], yq_ref.dtype)

    scale_y = scale_ref[0, 0]
    yq = yq_ref[...]
    if use_int8:
        g = jnp.dot(yq, wg_ref[...], preferred_element_type=jnp.int32).astype(jnp.float32)
        u = jnp.dot(yq, wu_ref[...], preferred_element_type=jnp.int32).astype(jnp.float32)
    else:
        g = jnp.dot(yq, wg_ref[...], preferred_element_type=jnp.float32)
        u = jnp.dot(yq, wu_ref[...], preferred_element_type=jnp.float32)
    g = g * scale_y + bg_ref[...]
    u = u * scale_y + bu_ref[...]
    g = g * jax.nn.sigmoid(g)               # SiLU
    p = g * u
    p = jnp.where(jnp.isnan(p), 0.0, p)     # torch nan_to_num before quant(p)

    ap = jnp.abs(p)
    if m != m_pad:                          # zero-pad rows carry a bias-only term;
        row = pl.program_id(0) * tm + lax.broadcasted_iota(jnp.int32, (tm, 1), 0)
        ap = jnp.where(row < m, ap, 0.0)    # keep them out of the global abs-max
    amax_ref[...] = _row_group_absmax(ap, tm)
    p_ref[...] = p.astype(p_ref.dtype)


def _down_kernel(scale_ref, p_ref, wd_ref, bd_ref, o_ref, pq_ref, *, use_int8):
    """Pass 3: quant(p) @ sign(W_d) column tile + b_d."""
    @pl.when(pl.program_id(1) == 0)
    def _():
        pq_ref[...] = _quantize(p_ref[...].astype(jnp.float32),
                                scale_ref[0, 1], pq_ref.dtype)

    pq = pq_ref[...]
    if use_int8:
        acc = jnp.dot(pq, wd_ref[...], preferred_element_type=jnp.int32).astype(jnp.float32)
    else:
        acc = jnp.dot(pq, wd_ref[...], preferred_element_type=jnp.float32)
    o_ref[...] = (acc * scale_ref[0, 0] + bd_ref[...]).astype(o_ref.dtype)


def _fused_small_kernel(x_ref, wg_ref, wu_ref, wd_ref, bg_ref, bu_ref, bd_ref,
                        o_ref, *, d, d_pad, eps):
    """Single-call fast path: the whole activation fits in VMEM, so the three
    launches and both intermediate HBM round trips are removed."""
    y = _rms_norm_rows(x_ref[...].astype(jnp.float32), d, d_pad, eps)
    s_y, inv_y = _scale_scalars(jnp.max(jnp.abs(y)))
    yq = _quantize(y, inv_y, jnp.bfloat16)
    g = jnp.dot(yq, wg_ref[...], preferred_element_type=jnp.float32) * s_y + bg_ref[...]
    u = jnp.dot(yq, wu_ref[...], preferred_element_type=jnp.float32) * s_y + bu_ref[...]
    g = g * jax.nn.sigmoid(g)
    p = g * u
    p = jnp.where(jnp.isnan(p), 0.0, p)
    s_p, inv_p = _scale_scalars(jnp.max(jnp.abs(p)))
    pq = _quantize(p, inv_p, jnp.bfloat16)
    o_ref[...] = (jnp.dot(pq, wd_ref[...], preferred_element_type=jnp.float32) * s_p
                  + bd_ref[...]).astype(o_ref.dtype)


# --------------------------------------------------------------------------- #
# Wrapper
# --------------------------------------------------------------------------- #
def _prep_w(w, d, d_pad, dtype):
    # torch: out = xq @ sign(W).T (contracts W's hidden axis) -> pass sign(W).T
    wt = jnp.sign(w).T.astype(dtype)
    if d_pad != d:
        wt = jnp.pad(wt, ((0, d_pad - d), (0, d_pad - d)))
    return wt


def _prep_b(b, d, d_pad):
    b2 = b.reshape(1, d).astype(jnp.float32)
    if d_pad != d:
        b2 = jnp.pad(b2, ((0, 0), (0, d_pad - d)))
    return b2


def matmul_free_glu(x, W_g, W_u, W_d, b_g, b_u, b_d, eps=EPS, force_tiled=False):
    orig_shape = x.shape
    d = int(orig_shape[-1])
    m = 1
    for s in orig_shape[:-1]:
        m *= int(s)
    d_pad = _round_up(d, LANE)
    x2 = x.reshape(m, d)
    xb = x2.dtype.itemsize

    gen = _tpu_generation()
    vmem_cap = _vmem_capacity_bytes()
    # ~48 MiB limit on 64 MiB/TC parts (v7x), ~96 MiB on 128 MiB parts (v5e/v6e).
    vmem_limit = max(12 * _MIB, min((vmem_cap * 3) // 4, 112 * _MIB))
    budget = (vmem_limit * 7) // 10

    # ------------------- single-call fast path (small activations) -------------------
    fast_bytes = m * d_pad * (xb + 6 * 4) + 3 * d_pad * d_pad * 2 + m * d_pad * 4
    if (not force_tiled) and fast_bytes <= 8 * _MIB:
        xp = x2 if d_pad == d else jnp.pad(x2, ((0, 0), (0, d_pad - d)))
        out = pl.pallas_call(
            functools.partial(_fused_small_kernel, d=d, d_pad=d_pad, eps=eps),
            out_shape=jax.ShapeDtypeStruct((m, d_pad), jnp.float32),
            compiler_params=pltpu.CompilerParams(vmem_limit_bytes=vmem_limit),
        )(xp,
          _prep_w(W_g, d, d_pad, jnp.bfloat16),
          _prep_w(W_u, d, d_pad, jnp.bfloat16),
          _prep_w(W_d, d, d_pad, jnp.bfloat16),
          _prep_b(b_g, d, d_pad), _prep_b(b_u, d, d_pad), _prep_b(b_d, d, d_pad))
        if d_pad != d:
            out = out[:, :d]
        return out.reshape(orig_shape)

    # ------------------------------ tiled three-pass path ----------------------------
    tn = 256 if d_pad % 256 == 0 else LANE          # output-column tile (256 fills MXU)
    m16 = _round_up(m, 16)

    def ws1(t):   # pass 1: x in (native) + y out (bf16) + f32 temporaries
        return t * d_pad * (2 * xb + 2 * 2 + 20)

    def ws2(t):   # pass 2: y in, 2 weight tiles, yq scratch, p out, f32 temporaries
        return (2 * t * d_pad * 2 + 4 * d_pad * tn * 2 + t * d_pad * 2
                + t * d_pad * 4 + 2 * t * tn * 2 + 10 * t * tn * 4)

    def ws3(t):   # pass 3: p in, weight tile, pq scratch, out, f32 temporaries
        return (2 * t * d_pad * 2 + 2 * d_pad * tn * 2 + t * d_pad * 2
                + t * d_pad * 4 + 2 * t * tn * 4 + 8 * t * tn * 4)

    def pick_tm(ws_fn):
        for t in (2048, 1024, 512, 256, 128, 64, 32, 16):
            if t <= m16 and ws_fn(t) <= budget:
                return t
        return 16

    tm1, tm2, tm3 = pick_tm(ws1), pick_tm(ws2), pick_tm(ws3)
    m_pad = _round_up(m, max(tm1, tm2, tm3))        # all tm are powers of two -> valid
    n_j = d_pad // tn

    # int8 MXU operands on v5e/v6e (exact small integers); bf16 elsewhere (v7x has no
    # integer MXU) and for sub-32-row tiles.
    use_int8 = (gen in (5, 6)) and tm2 % 32 == 0 and tm3 % 32 == 0
    qdtype = jnp.int8 if use_int8 else jnp.bfloat16

    xp = x2
    if m_pad != m or d_pad != d:
        xp = jnp.pad(x2, ((0, m_pad - m), (0, d_pad - d)))

    wg = _prep_w(W_g, d, d_pad, qdtype)
    wu = _prep_w(W_u, d, d_pad, qdtype)
    wd = _prep_w(W_d, d, d_pad, qdtype)
    bg, bu, bd = (_prep_b(b, d, d_pad) for b in (b_g, b_u, b_d))

    cp1 = pltpu.CompilerParams(dimension_semantics=("parallel",),
                               vmem_limit_bytes=vmem_limit)
    cp23 = pltpu.CompilerParams(dimension_semantics=("parallel", "arbitrary"),
                                vmem_limit_bytes=vmem_limit)
    smem_spec = pl.BlockSpec(memory_space=pltpu.MemorySpace.SMEM)

    # Pass 1: rms_norm + global abs-max of y.
    n1 = m_pad // tm1
    y_bf, amax_y = pl.pallas_call(
        functools.partial(_norm_stats_kernel, d=d, d_pad=d_pad, eps=eps),
        grid=(n1,),
        in_specs=[pl.BlockSpec((tm1, d_pad), lambda i: (i, 0))],
        out_specs=(pl.BlockSpec((tm1, d_pad), lambda i: (i, 0)),
                   pl.BlockSpec((8, LANE), lambda i: (i, 0))),
        out_shape=(jax.ShapeDtypeStruct((m_pad, d_pad), jnp.bfloat16),
                   jax.ShapeDtypeStruct((n1 * 8, LANE), jnp.float32)),
        compiler_params=cp1,
    )(xp)
    scale_y = _scale_vec(jnp.max(amax_y))

    # Pass 2: gate/up projections + SiLU gating, column-tiled weights.
    n2 = m_pad // tm2
    p_bf, amax_p = pl.pallas_call(
        functools.partial(_gate_up_kernel, tm=tm2, m=m, m_pad=m_pad, use_int8=use_int8),
        grid=(n2, n_j),
        in_specs=[smem_spec,
                  pl.BlockSpec((tm2, d_pad), lambda i, j: (i, 0)),
                  pl.BlockSpec((d_pad, tn), lambda i, j: (0, j)),
                  pl.BlockSpec((d_pad, tn), lambda i, j: (0, j)),
                  pl.BlockSpec((1, tn), lambda i, j: (0, j)),
                  pl.BlockSpec((1, tn), lambda i, j: (0, j))],
        out_specs=(pl.BlockSpec((tm2, tn), lambda i, j: (i, j)),
                   pl.BlockSpec((8, tn), lambda i, j: (i, j))),
        out_shape=(jax.ShapeDtypeStruct((m_pad, d_pad), jnp.bfloat16),
                   jax.ShapeDtypeStruct((n2 * 8, d_pad), jnp.float32)),
        scratch_shapes=[pltpu.VMEM((tm2, d_pad), qdtype)],
        compiler_params=cp23,
    )(scale_y, y_bf, wg, wu, bg, bu)
    scale_p = _scale_vec(jnp.max(amax_p))

    # Pass 3: down projection, column-tiled weights.
    n3 = m_pad // tm3
    out = pl.pallas_call(
        functools.partial(_down_kernel, use_int8=use_int8),
        grid=(n3, n_j),
        in_specs=[smem_spec,
                  pl.BlockSpec((tm3, d_pad), lambda i, j: (i, 0)),
                  pl.BlockSpec((d_pad, tn), lambda i, j: (0, j)),
                  pl.BlockSpec((1, tn), lambda i, j: (0, j))],
        out_specs=pl.BlockSpec((tm3, tn), lambda i, j: (i, j)),
        out_shape=jax.ShapeDtypeStruct((m_pad, d_pad), jnp.float32),
        scratch_shapes=[pltpu.VMEM((tm3, d_pad), qdtype)],
        compiler_params=cp23,
    )(scale_p, p_bf, wd, bd)

    if m_pad != m or d_pad != d:
        # Note: for unaligned d this slice is an extra pass over the output; keep the
        # padded layout if the downstream consumer can use it directly.
        out = out[:m, :d]
    return out.reshape(orig_shape)


# --------------------------------------------------------------------------- #
# Pure-JAX reference (faithful port of the PyTorch module) for the self-check.
# --------------------------------------------------------------------------- #
def _reference_forward(x, W_g, W_u, W_d, b_g, b_u, b_d, eps=EPS):
    def act_quant(t):
        t = jnp.where(jnp.isnan(t), 0.0, t)
        amax = jnp.max(jnp.abs(t))
        scale = jnp.where(jnp.logical_or(amax == 0.0, jnp.isnan(amax)), 1.0, amax / QMAX)
        return jnp.clip(jnp.round(t / scale), QMIN, QMAX) * scale

    def mmfree(t, w):
        return jnp.dot(act_quant(t), jnp.sign(w).T, preferred_element_type=jnp.float32)

    mean = jnp.mean(x, axis=-1, keepdims=True)
    var = jnp.mean((x - mean) ** 2, axis=-1, keepdims=True)
    y = (x - mean) / jnp.sqrt(jnp.maximum(var + eps, 1e-10))
    y = act_quant(y)
    g = mmfree(y, W_g) + b_g
    u = mmfree(y, W_u) + b_u
    g = g * jax.nn.sigmoid(g)
    p = g * u
    return mmfree(p, W_d) + b_d


if __name__ == "__main__":
    # input_size == hidden_size == 32 (required by the module's own forward math)
    B, S, D = 2, 8, 32
    key = jax.random.PRNGKey(0)
    kx, kg, ku, kd, kbg, kbu, kbd = jax.random.split(key, 7)

    x = jax.random.normal(kx, (B, S, D), dtype=jnp.float32)
    W_g = jax.random.normal(kg, (D, D), dtype=jnp.float32)
    W_u = jax.random.normal(ku, (D, D), dtype=jnp.float32)
    W_d = jax.random.normal(kd, (D, D), dtype=jnp.float32)
    b_g = jax.random.normal(kbg, (D,), dtype=jnp.float32)
    b_u = jax.random.normal(kbu, (D,), dtype=jnp.float32)
    b_d = jax.random.normal(kbd, (D,), dtype=jnp.float32)

    ref = _reference_forward(x, W_g, W_u, W_d, b_g, b_u, b_d)
    ref_norm = jnp.maximum(jnp.sqrt(jnp.sum(ref ** 2)), 1e-6)

    # Small shapes take the fused single-call path; also exercise the tiled
    # three-pass path explicitly so both code paths are covered.
    out_fused = jax.jit(matmul_free_glu)(x, W_g, W_u, W_d, b_g, b_u, b_d)
    out_tiled = jax.jit(functools.partial(matmul_free_glu, force_tiled=True))(
        x, W_g, W_u, W_d, b_g, b_u, b_d)
    jax.block_until_ready((out_fused, out_tiled))

    # Loose sanity checks: fake-quant rounding boundaries are sensitive to float op
    # ordering, and the tiled path stores y/p as bf16 intermediates.
    for name, out, tol in (("fused", out_fused, 0.08), ("tiled", out_tiled, 0.15)):
        assert out.shape == (B, S, D) and out.dtype == jnp.float32
        rel = float(jnp.sqrt(jnp.sum((out - ref) ** 2)) / ref_norm)
        assert rel < tol, f"{name} relative Frobenius error too large: {rel}"

    print("KERNEL_OK")
</pallas_src>

<mosaic_0001>
module attributes {stable_mosaic.version = 11 : i64} {
  func.func @_fused_small_kernel(%arg0: memref<16x128xf32, #tpu.memory_space<vmem>>, %arg1: memref<128x128xbf16, #tpu.memory_space<vmem>>, %arg2: memref<128x128xbf16, #tpu.memory_space<vmem>>, %arg3: memref<128x128xbf16, #tpu.memory_space<vmem>>, %arg4: memref<1x128xf32, #tpu.memory_space<vmem>>, %arg5: memref<1x128xf32, #tpu.memory_space<vmem>>, %arg6: memref<1x128xf32, #tpu.memory_space<vmem>>, %arg7: memref<16x128xf32, #tpu.memory_space<vmem>>) attributes {dimension_semantics = [], scalar_prefetch = 0 : i64, scratch_operands = 0 : i64, tpu.core_type = #tpu.core_type<tc>} {
    %c0 = arith.constant 0 : index
    %c0_0 = arith.constant 0 : index
    %0 = vector.load %arg0[%c0, %c0_0] : memref<16x128xf32, #tpu.memory_space<vmem>>, vector<16x128xf32>
    %1 = tpu.iota {dimensions = array<i32: 1>} : vector<16x128xi32>
    %c32_i32 = arith.constant 32 : i32
    %2 = vector.broadcast %c32_i32 : i32 to vector<16x128xi32>
    %3 = arith.cmpi slt, %1, %2 : vector<16x128xi32>
    %cst = arith.constant dense<0.000000e+00> : vector<16xf32>
    %4 = vector.multi_reduction <add>, %0, %cst [1] : vector<16x128xf32> to vector<16xf32>
    %5 = vector.shape_cast %4 : vector<16xf32> to vector<16x1xf32>
    %cst_1 = arith.constant 3.125000e-02 : f32
    %6 = vector.broadcast %cst_1 : f32 to vector<16x1xf32>
    %7 = arith.mulf %5, %6 : vector<16x1xf32>
    %8 = vector.broadcast %7 : vector<16x1xf32> to vector<16x128xf32>
    %9 = arith.subf %0, %8 : vector<16x128xf32>
    %10 = arith.mulf %9, %9 : vector<16x128xf32>
    %cst_2 = arith.constant 0.000000e+00 : f32
    %11 = vector.broadcast %cst_2 : f32 to vector<16x128xf32>
    %12 = arith.select %3, %10, %11 : vector<16x128xi1>, vector<16x128xf32>
    %cst_3 = arith.constant dense<0.000000e+00> : vector<16xf32>
    %13 = vector.multi_reduction <add>, %12, %cst_3 [1] : vector<16x128xf32> to vector<16xf32>
    %14 = vector.shape_cast %13 : vector<16xf32> to vector<16x1xf32>
    %cst_4 = arith.constant 3.125000e-02 : f32
    %15 = vector.broadcast %cst_4 : f32 to vector<16x1xf32>
    %16 = arith.mulf %14, %15 : vector<16x1xf32>
    %cst_5 = arith.constant 9.99999993E-9 : f32
    %17 = vector.broadcast %cst_5 : f32 to vector<16x1xf32>
    %18 = arith.addf %16, %17 : vector<16x1xf32>
    %cst_6 = arith.constant 1.000000e-10 : f32
    %19 = vector.broadcast %cst_6 : f32 to vector<16x1xf32>
    %20 = arith.maximumf %18, %19 : vector<16x1xf32>
    %21 = math.rsqrt %20 : vector<16x1xf32>
    %22 = vector.broadcast %21 : vector<16x1xf32> to vector<16x128xf32>
    %23 = arith.mulf %22, %9 : vector<16x128xf32>
    %cst_7 = arith.constant 0.000000e+00 : f32
    %24 = vector.broadcast %cst_7 : f32 to vector<16x128xf32>
    %25 = arith.select %3, %23, %24 : vector<16x128xi1>, vector<16x128xf32>
    %26 = arith.cmpf one, %25, %25 : vector<16x128xf32>
    %cst_8 = arith.constant 0.000000e+00 : f32
    %27 = vector.broadcast %cst_8 : f32 to vector<16x128xf32>
    %28 = arith.select %26, %27, %25 : vector<16x128xi1>, vector<16x128xf32>
    %29 = math.absf %28 : vector<16x128xf32>
    %30 = vector.shape_cast %29 : vector<16x128xf32> to vector<1x16x128xf32>
    %cst_9 = arith.constant dense<0xFF800000> : vector<1xf32>
    %31 = vector.multi_reduction <maximumf>, %30, %cst_9 [1, 2] : vector<1x16x128xf32> to vector<1xf32>
    %32 = vector.shape_cast %31 : vector<1xf32> to vector<1x1x1xf32>
    %33 = vector.extract %32[0, 0, 0] : f32 from vector<1x1x1xf32>
    %cst_10 = arith.constant 0.000000e+00 : f32
    %34 = arith.cmpf oeq, %33, %cst_10 : f32
    %35 = arith.cmpf one, %33, %33 : f32
    %36 = arith.ori %34, %35 : i1
    %cst_11 = arith.constant 1.270000e+02 : f32
    %37 = arith.divf %33, %cst_11 : f32
    %cst_12 = arith.constant 1.000000e+00 : f32
    %38 = arith.select %36, %cst_12, %37 : f32
    %cst_13 = arith.constant 1.000000e+00 : f32
    %39 = arith.divf %cst_13, %38 : f32
    %40 = vector.broadcast %39 : f32 to vector<16x128xf32>
    %41 = arith.mulf %28, %40 : vector<16x128xf32>
    %42 = math.roundeven %41 : vector<16x128xf32>
    %cst_14 = arith.constant -1.280000e+02 : f32
    %cst_15 = arith.constant 1.270000e+02 : f32
    %43 = vector.broadcast %cst_14 : f32 to vector<16x128xf32>
    %44 = arith.maximumf %43, %42 : vector<16x128xf32>
    %45 = vector.broadcast %cst_15 : f32 to vector<16x128xf32>
    %46 = arith.minimumf %45, %44 : vector<16x128xf32>
    %47 = arith.truncf %46 : vector<16x128xf32> to vector<16x128xbf16>
    %c0_16 = arith.constant 0 : index
    %c0_17 = arith.constant 0 : index
    %48 = vector.load %arg1[%c0_16, %c0_17] : memref<128x128xbf16, #tpu.memory_space<vmem>>, vector<128x128xbf16>
    %cst_18 = arith.constant dense<0.000000e+00> : vector<16x128xf32>
    %49 = tpu.matmul %47, %48, %cst_18 {dimension_numbers = #tpu.dot_dimension_numbers<[1], [0], [0], [1], [0, 0, 1, 1], [], []>} : vector<16x128xbf16>, vector<128x128xbf16>, vector<16x128xf32> -> vector<16x128xf32>
    %50 = vector.broadcast %38 : f32 to vector<16x128xf32>
    %51 = arith.mulf %49, %50 : vector<16x128xf32>
    %c0_19 = arith.constant 0 : index
    %c0_20 = arith.constant 0 : index
    %52 = vector.load %arg4[%c0_19, %c0_20] : memref<1x128xf32, #tpu.memory_space<vmem>>, vector<1x128xf32>
    %53 = vector.broadcast %52 : vector<1x128xf32> to vector<16x128xf32>
    %54 = arith.addf %51, %53 : vector<16x128xf32>
    %c0_21 = arith.constant 0 : index
    %c0_22 = arith.constant 0 : index
    %55 = vector.load %arg2[%c0_21, %c0_22] : memref<128x128xbf16, #tpu.memory_space<vmem>>, vector<128x128xbf16>
    %cst_23 = arith.constant dense<0.000000e+00> : vector<16x128xf32>
    %56 = tpu.matmul %47, %55, %cst_23 {dimension_numbers = #tpu.dot_dimension_numbers<[1], [0], [0], [1], [0, 0, 1, 1], [], []>} : vector<16x128xbf16>, vector<128x128xbf16>, vector<16x128xf32> -> vector<16x128xf32>
    %57 = vector.broadcast %38 : f32 to vector<16x128xf32>
    %58 = arith.mulf %56, %57 : vector<16x128xf32>
    %c0_24 = arith.constant 0 : index
    %c0_25 = arith.constant 0 : index
    %59 = vector.load %arg5[%c0_24, %c0_25] : memref<1x128xf32, #tpu.memory_space<vmem>>, vector<1x128xf32>
    %60 = vector.broadcast %59 : vector<1x128xf32> to vector<16x128xf32>
    %61 = arith.addf %58, %60 : vector<16x128xf32>
    %62 = arith.negf %54 : vector<16x128xf32>
    %63 = math.exp %62 : vector<16x128xf32>
    %cst_26 = arith.constant 1.000000e+00 : f32
    %64 = vector.broadcast %cst_26 : f32 to vector<16x128xf32>
    %65 = arith.addf %64, %63 : vector<16x128xf32>
    %66 = arith.divf %64, %65 : vector<16x128xf32>
    %67 = arith.mulf %54, %66 : vector<16x128xf32>
    %68 = arith.mulf %67, %61 : vector<16x128xf32>
    %69 = arith.cmpf one, %68, %68 : vector<16x128xf32>
    %cst_27 = arith.constant 0.000000e+00 : f32
    %70 = vector.broadcast %cst_27 : f32 to vector<16x128xf32>
    %71 = arith.select %69, %70, %68 : vector<16x128xi1>, vector<16x128xf32>
    %72 = math.absf %71 : vector<16x128xf32>
    %73 = vector.shape_cast %72 : vector<16x128xf32> to vector<1x16x128xf32>
    %cst_28 = arith.constant dense<0xFF800000> : vector<1xf32>
    %74 = vector.multi_reduction <maximumf>, %73, %cst_28 [1, 2] : vector<1x16x128xf32> to vector<1xf32>
    %75 = vector.shape_cast %74 : vector<1xf32> to vector<1x1x1xf32>
    %76 = vector.extract %75[0, 0, 0] : f32 from vector<1x1x1xf32>
    %cst_29 = arith.constant 0.000000e+00 : f32
    %77 = arith.cmpf oeq, %76, %cst_29 : f32
    %78 = arith.cmpf one, %76, %76 : f32
    %79 = arith.ori %77, %78 : i1
    %cst_30 = arith.constant 1.270000e+02 : f32
    %80 = arith.divf %76, %cst_30 : f32
    %cst_31 = arith.constant 1.000000e+00 : f32
    %81 = arith.select %79, %cst_31, %80 : f32
    %cst_32 = arith.constant 1.000000e+00 : f32
    %82 = arith.divf %cst_32, %81 : f32
    %83 = vector.broadcast %82 : f32 to vector<16x128xf32>
    %84 = arith.mulf %71, %83 : vector<16x128xf32>
    %85 = math.roundeven %84 : vector<16x128xf32>
    %cst_33 = arith.constant -1.280000e+02 : f32
    %cst_34 = arith.constant 1.270000e+02 : f32
    %86 = vector.broadcast %cst_33 : f32 to vector<16x128xf32>
    %87 = arith.maximumf %86, %85 : vector<16x128xf32>
    %88 = vector.broadcast %cst_34 : f32 to vector<16x128xf32>
    %89 = arith.minimumf %88, %87 : vector<16x128xf32>
    %90 = arith.truncf %89 : vector<16x128xf32> to vector<16x128xbf16>
    %c0_35 = arith.constant 0 : index
    %c0_36 = arith.constant 0 : index
    %91 = vector.load %arg3[%c0_35, %c0_36] : memref<128x128xbf16, #tpu.memory_space<vmem>>, vector<128x128xbf16>
    %cst_37 = arith.constant dense<0.000000e+00> : vector<16x128xf32>
    %92 = tpu.matmul %90, %91, %cst_37 {dimension_numbers = #tpu.dot_dimension_numbers<[1], [0], [0], [1], [0, 0, 1, 1], [], []>} : vector<16x128xbf16>, vector<128x128xbf16>, vector<16x128xf32> -> vector<16x128xf32>
    %93 = vector.broadcast %81 : f32 to vector<16x128xf32>
    %94 = arith.mulf %92, %93 : vector<16x128xf32>
    %c0_38 = arith.constant 0 : index
    %c0_39 = arith.constant 0 : index
    %95 = vector.load %arg6[%c0_38, %c0_39] : memref<1x128xf32, #tpu.memory_space<vmem>>, vector<1x128xf32>
    %96 = vector.broadcast %95 : vector<1x128xf32> to vector<16x128xf32>
    %97 = arith.addf %94, %96 : vector<16x128xf32>
    %c0_40 = arith.constant 0 : index
    %c0_41 = arith.constant 0 : index
    %98 = vector.load %arg7[%c0_40, %c0_41] : memref<16x128xf32, #tpu.memory_space<vmem>>, vector<16x128xf32>
    tpu.vector_store %arg7[%c0_40, %c0_41], %97 {strides = array<i32>} : memref<16x128xf32, #tpu.memory_space<vmem>>, vector<16x128xf32>,
    return
  }
}

</mosaic_0001>

<llo_original>
// kernel: matmul_free_glu.1
$region0: #{matmul_free_glu.1}
  #allocation0 [shape = 'u32[]', space=smem, size = 0x4, offset = 0x4, fixed_abs, tag = 'smem constant byte address 0x4 - core index']
  #allocation1 [shape = 'u32[144,128]{1,0:T(1,128)}', space=vmem, size = 0x12000, scoped, tag = 'internal scratch']
  %s0 = inlined_call_operand.vmem [shape: f32[16,128], index: 0, kind: input, shape index: {}]
  %s1 = inlined_call_operand.vmem [shape: bf16[128,128], index: 1, kind: input, shape index: {}]
  %s2 = inlined_call_operand.vmem [shape: bf16[128,128], index: 2, kind: input, shape index: {}]
  %s3 = inlined_call_operand.vmem [shape: bf16[128,128], index: 3, kind: input, shape index: {}]
  %s4 = inlined_call_operand.vmem [shape: f32[1,128], index: 4, kind: input, shape index: {}]
  %s5 = inlined_call_operand.vmem [shape: f32[1,128], index: 5, kind: input, shape index: {}]
  %s6 = inlined_call_operand.vmem [shape: f32[1,128], index: 6, kind: input, shape index: {}]
  %s7 = inlined_call_operand.vmem [shape: f32[16,128], index: 7, kind: output, shape index: {}]
  %s8 = sld [smem:[#allocation0]]
  $region38: #{matmul_free_glu.1} parent=0
    _
  %s10 = ssub.s32 1, %s8
  %s11 = scalar_select 0, %s10, %s8
  // Predicated region
  $region2: #{matmul_free_glu.1} parent=0 // pred_check
    _
  $region3: #{matmul_free_glu.1} parent=0 // pred_check_branch
    %13 = sbr.rel (0) target = $region5
  $region4: #{matmul_free_glu.1} parent=0 // pred_region
    _
  $region5: #{matmul_free_glu.1} parent=0 // pred_fallthru
    _
  // Predicated region
  $region6: #{matmul_free_glu.1} parent=0 // pred_check
    _
  $region7: #{matmul_free_glu.1} parent=0 // pred_check_branch
    %15 = sbr.rel (0) target = $region9
  $region8: #{matmul_free_glu.1} parent=0 // pred_region
    _
  $region9: #{matmul_free_glu.1} parent=0 // pred_fallthru
    _
  // Predicated region
  $region10: #{matmul_free_glu.1} parent=0 // pred_check
    _
  $region11: #{matmul_free_glu.1} parent=0 // pred_check_branch
    %17 = sbr.rel (0) target = $region13
  $region12: #{matmul_free_glu.1} parent=0 // pred_region
    _
  $region13: #{matmul_free_glu.1} parent=0 // pred_fallthru
    _
  // Predicated region
  $region14: #{matmul_free_glu.1} parent=0 // pred_check
    _
  $region15: #{matmul_free_glu.1} parent=0 // pred_check_branch
    %19 = sbr.rel (0) target = $region17
  $region16: #{matmul_free_glu.1} parent=0 // pred_region
    _
  $region17: #{matmul_free_glu.1} parent=0 // pred_fallthru
    _
  // Predicated region
  $region18: #{matmul_free_glu.1} parent=0 // pred_check
    _
  $region19: #{matmul_free_glu.1} parent=0 // pred_check_branch
    %21 = sbr.rel (0) target = $region21
  $region20: #{matmul_free_glu.1} parent=0 // pred_region
    _
  $region21: #{matmul_free_glu.1} parent=0 // pred_fallthru
    _
  // Predicated region
  $region22: #{matmul_free_glu.1} parent=0 // pred_check
    _
  $region23: #{matmul_free_glu.1} parent=0 // pred_check_branch
    %23 = sbr.rel (0) target = $region25
  $region24: #{matmul_free_glu.1} parent=0 // pred_region
    _
  $region25: #{matmul_free_glu.1} parent=0 // pred_fallthru
    _
  // Predicated region
  $region26: #{matmul_free_glu.1} parent=0 // pred_check
    _
  $region27: #{matmul_free_glu.1} parent=0 // pred_check_branch
    %25 = sbr.rel (0) target = $region29
  $region28: #{matmul_free_glu.1} parent=0 // pred_region
    _
  $region29: #{matmul_free_glu.1} parent=0 // pred_fallthru
    _
  %v27 = vld [vmem:[%s0] sm:$0xff]
  %v28 = vld [vmem:[%s0 + $0x8] sm:$0xff]
  %v29 = vlaneseq
  %v30 = vand.u32 %v29, 127
  %vm31 = vcmp.lt.s32.totalorder %v30, 32
  %32 = vadd.xlane.f32.xlu0 %v27
  %v33 = vpop.xlane.xlu0 %32
  %34 = vadd.xlane.f32.xlu0 %v28
  %v35 = vpop.xlane.xlu0 %34
  %v36 = vmul.f32 %v33, 0.03125
  %v37 = vmul.f32 %v35, 0.03125
  %v38 = vsub.f32 %v27, %v36
  %v39 = vsub.f32 %v28, %v37
  %v40 = vmul.f32 %v38, %v38
  %v41 = vmul.f32 %v39, %v39
  %v42 = vsel %vm31, %v40, 0.0
  %v43 = vsel %vm31, %v41, 0.0
  %44 = vadd.xlane.f32.xlu0 %v42
  %v45 = vpop.xlane.xlu0 %44
  %46 = vadd.xlane.f32.xlu0 %v43
  %v47 = vpop.xlane.xlu0 %46
  %v48 = vmul.f32 %v45, 0.03125
  %v49 = vmul.f32 %v47, 0.03125
  %v50 = vadd.f32 %v48, 1e-08
  %v51 = vadd.f32 %v49, 1e-08
  %v52 = vmax.f32 %v50, 1e-10
  %v53 = vmax.f32 %v51, 1e-10
  %v54 = vrsqrt.pop %v52
  %v55 = vrsqrt.pop %v53
  %v56 = vmul.f32 %v54, %v38
  %v57 = vmul.f32 %v55, %v39
  %v58 = vsel %vm31, %v56, 0.0
  %v59 = vsel %vm31, %v57, 0.0
  %vm60 = vcmp.ne.f32.partialorder %v58, %v58
  %vm61 = vcmp.ne.f32.partialorder %v59, %v59
  %v62 = vsel %vm60, 0.0, %v58
  %v63 = vsel %vm61, 0.0, %v59
  %v64 = vand.u32 2147483647, %v62
  %v65 = vand.u32 2147483647, %v63
  %v66 = vmax.f32 %v64, %v65
  %67 = vmax.xlane.f32.xlu0 %v66
  %v68 = vpop.xlane.xlu0 %67
  %v69 = vrot.slane %v68, 4
  %v70 = vmax.f32 %v68, %v69
  %v71 = vrot.slane %v70, 2
  %v72 = vmax.f32 %v70, %v71
  %v73 = vrot.slane %v72, 1
  %v74 = vmax.f32 %v72, %v73
  %s75 = vtos %v74
  %p76 = scmp.eq.f32.partialorder %s75, 0.0
  %p77 = scmp.ne.f32.partialorder %s75, %s75
  %p78 = por %p76, %p77
  %v79 = vrcp.pop 127.0
  %s80 = vtos %v79
  %s81 = smul.f32 %s75, %s80
  %s82 = scalar_select %p78, 1.0, %s81
  %v83 = vstv %s82
  %v84 = vrcp.pop %v83
  %s85 = vtos %v84
  %v86 = vstv %s85
  %v87 = vmul.f32 %v62, %v86
  %v88 = vmul.f32 %v63, %v86
  %v89 = vround.ne.pseudo %v87
  %v90 = vround.ne.pseudo %v88
  %v91 = vmax.f32 %v89, -128.0
  %v92 = vmax.f32 %v90, -128.0
  %v93 = vmin.f32 %v91, 127.0
  %v94 = vmin.f32 %v92, 127.0
  %v95 = vpack.c.bf16 %v94, %v93
  %v96 = vld [vmem:[%s1] sm:$0xf]
  %v97 = vld [vmem:[%s1 + $0x4] sm:$0xf]
  %v98 = vld [vmem:[%s1 + $0x8] sm:$0xf]
  %v99 = vld [vmem:[%s1 + $0xc] sm:$0xf]
  %v100 = vld [vmem:[%s1 + $0x10] sm:$0xf]
  %v101 = vld [vmem:[%s1 + $0x14] sm:$0xf]
  %v102 = vld [vmem:[%s1 + $0x18] sm:$0xf]
  %v103 = vld [vmem:[%s1 + $0x1c] sm:$0xf]
  %v104 = vld [vmem:[%s1 + $0x20] sm:$0xf]
  %v105 = vld [vmem:[%s1 + $0x24] sm:$0xf]
  %v106 = vld [vmem:[%s1 + $0x28] sm:$0xf]
  %v107 = vld [vmem:[%s1 + $0x2c] sm:$0xf]
  %v108 = vld [vmem:[%s1 + $0x30] sm:$0xf]
  %v109 = vld [vmem:[%s1 + $0x34] sm:$0xf]
  %v110 = vld [vmem:[%s1 + $0x38] sm:$0xf]
  %v111 = vld [vmem:[%s1 + $0x3c] sm:$0xf]
  %v128 = vunpack.c.l.b16 %v96
  %v129 = vunpack.c.l.b16 %v97
  %v130 = vunpack.c.l.b16 %v98
  %v131 = vunpack.c.l.b16 %v99
  %v132 = vunpack.c.l.b16 %v100
  %v133 = vunpack.c.l.b16 %v101
  %v134 = vunpack.c.l.b16 %v102
  %v135 = vunpack.c.l.b16 %v103
  %v136 = vunpack.c.l.b16 %v104
  %v137 = vunpack.c.l.b16 %v105
  %v138 = vunpack.c.l.b16 %v106
  %v139 = vunpack.c.l.b16 %v107
  %v140 = vunpack.c.l.b16 %v108
  %v141 = vunpack.c.l.b16 %v109
  %v142 = vunpack.c.l.b16 %v110
  %v143 = vunpack.c.l.b16 %v111
  %v144 = vpack.c.b16 %v129, %v128
  %v145 = vpack.c.b16 %v131, %v130
  %v146 = vpack.c.b16 %v133, %v132
  %v147 = vpack.c.b16 %v135, %v134
  %v148 = vpack.c.b16 %v137, %v136
  %v149 = vpack.c.b16 %v139, %v138
  %v150 = vpack.c.b16 %v141, %v140
  %v151 = vpack.c.b16 %v143, %v142
  %160 = vmatprep.subr.bf16.mxu0 0
  %161 = vmatpush1.bf16.msra.mxu0 %v151
  %162 = vmatprep.subr.bf16.mxu0 0
  %163 = vmatpush1.bf16.msra.mxu0 %v150
  %164 = vmatprep.subr.bf16.mxu0 0
  %165 = vmatpush1.bf16.msra.mxu0 %v149
  %166 = vmatprep.subr.bf16.mxu0 0
  %167 = vmatpush1.bf16.msra.mxu0 %v148
  %168 = vmatprep.subr.bf16.mxu0 0
  %169 = vmatpush1.bf16.msra.mxu0 %v147
  %170 = vmatprep.subr.bf16.mxu0 0
  %171 = vmatpush1.bf16.msra.mxu0 %v146
  %172 = vmatprep.subr.bf16.mxu0 0
  %173 = vmatpush1.bf16.msra.mxu0 %v145
  %174 = vmatprep.subr.bf16.mxu0 0
  %175 = vmatpush1.bf16.msra.mxu0 %v144
  %176 = vmatprep.subr.bf16.mxu0 0
  %177 = vmatpush2.bf16.msra.mxu0 0
  %178 = vmatprep.subr.bf16.mxu0 0
  %179 = vmatpush2.bf16.msra.mxu0 0
  %180 = vmatprep.subr.bf16.mxu0 0
  %181 = vmatpush2.bf16.msra.mxu0 0
  %182 = vmatprep.subr.bf16.mxu0 0
  %183 = vmatpush2.bf16.msra.mxu0 0
  %184 = vmatprep.subr.bf16.mxu0 0
  %185 = vmatpush2.bf16.msra.mxu0 0
  %186 = vmatprep.subr.bf16.mxu0 0
  %187 = vmatpush2.bf16.msra.mxu0 0
  %188 = vmatprep.subr.bf16.mxu0 0
  %189 = vmatpush2.bf16.msra.mxu0 0
  %190 = vmatprep.subr.bf16.mxu0 0
  %191 = vmatpush2.bf16.msra.mxu0 0
  %192 = vmatprep.mubr.bf16.mxu0 0
  %193 = vmatmul.mubr.bf16.gmra.mxu0 %v95
  %v194 = vpop.f32.mrf.mxu0
  %v195 = vadd.f32 0.0, %v194
  %v196 = vpop.f32.mrf.mxu0
  %v197 = vpop.f32.mrf.mxu0
  %v198 = vadd.f32 0.0, %v197
  %v199 = vpop.f32.mrf.mxu0
  %200 = vdwg.mxu0
  %v201 = vstv %s82
  %v202 = vmul.f32 %v195, %v201
  %v203 = vmul.f32 %v198, %v201
  %v204 = vld [vmem:[%s4] sm:$0x1]
  %v206 = vlaneseq
  %v207 = vshrl.u32 %v206, 7
  %v208 = vsub.s32 0, %v207
  %v209 = vrot.slane %v204, %v208
  %v211 = vadd.f32 %v202, %v209
  %v212 = vadd.f32 %v203, %v209
  %v213 = vld [vmem:[%s2] sm:$0xf]
  %v214 = vld [vmem:[%s2 + $0x4] sm:$0xf]
  %v215 = vld [vmem:[%s2 + $0x8] sm:$0xf]
  %v216 = vld [vmem:[%s2 + $0xc] sm:$0xf]
  %v217 = vld [vmem:[%s2 + $0x10] sm:$0xf]
  %v218 = vld [vmem:[%s2 + $0x14] sm:$0xf]
  %v219 = vld [vmem:[%s2 + $0x18] sm:$0xf]
  %v220 = vld [vmem:[%s2 + $0x1c] sm:$0xf]
  %v221 = vld [vmem:[%s2 + $0x20] sm:$0xf]
  %v222 = vld [vmem:[%s2 + $0x24] sm:$0xf]
  %v223 = vld [vmem:[%s2 + $0x28] sm:$0xf]
  %v224 = vld [vmem:[%s2 + $0x2c] sm:$0xf]
  %v225 = vld [vmem:[%s2 + $0x30] sm:$0xf]
  %v226 = vld [vmem:[%s2 + $0x34] sm:$0xf]
  %v227 = vld [vmem:[%s2 + $0x38] sm:$0xf]
  %v228 = vld [vmem:[%s2 + $0x3c] sm:$0xf]
  %v245 = vunpack.c.l.b16 %v213
  %v246 = vunpack.c.l.b16 %v214
  %v247 = vunpack.c.l.b16 %v215
  %v248 = vunpack.c.l.b16 %v216
  %v249 = vunpack.c.l.b16 %v217
  %v250 = vunpack.c.l.b16 %v218
  %v251 = vunpack.c.l.b16 %v219
  %v252 = vunpack.c.l.b16 %v220
  %v253 = vunpack.c.l.b16 %v221
  %v254 = vunpack.c.l.b16 %v222
  %v255 = vunpack.c.l.b16 %v223
  %v256 = vunpack.c.l.b16 %v224
  %v257 = vunpack.c.l.b16 %v225
  %v258 = vunpack.c.l.b16 %v226
  %v259 = vunpack.c.l.b16 %v227
  %v260 = vunpack.c.l.b16 %v228
  %v261 = vpack.c.b16 %v246, %v245
  %v262 = vpack.c.b16 %v248, %v247
  %v263 = vpack.c.b16 %v250, %v249
  %v264 = vpack.c.b16 %v252, %v251
  %v265 = vpack.c.b16 %v254, %v253
  %v266 = vpack.c.b16 %v256, %v255
  %v267 = vpack.c.b16 %v258, %v257
  %v268 = vpack.c.b16 %v260, %v259
  %277 = vmatprep.subr.bf16.mxu0 0
  %278 = vmatpush1.bf16.msra.mxu0 %v268
  %279 = vmatprep.subr.bf16.mxu0 0
  %280 = vmatpush1.bf16.msra.mxu0 %v267
  %281 = vmatprep.subr.bf16.mxu0 0
  %282 = vmatpush1.bf16.msra.mxu0 %v266
  %283 = vmatprep.subr.bf16.mxu0 0
  %284 = vmatpush1.bf16.msra.mxu0 %v265
  %285 = vmatprep.subr.bf16.mxu0 0
  %286 = vmatpush1.bf16.msra.mxu0 %v264
  %287 = vmatprep.subr.bf16.mxu0 0
  %288 = vmatpush1.bf16.msra.mxu0 %v263
  %289 = vmatprep.subr.bf16.mxu0 0
  %290 = vmatpush1.bf16.msra.mxu0 %v262
  %291 = vmatprep.subr.bf16.mxu0 0
  %292 = vmatpush1.bf16.msra.mxu0 %v261
  %293 = vmatprep.subr.bf16.mxu0 0
  %294 = vmatpush2.bf16.msra.mxu0 0
  %295 = vmatprep.subr.bf16.mxu0 0
  %296 = vmatpush2.bf16.msra.mxu0 0
  %297 = vmatprep.subr.bf16.mxu0 0
  %298 = vmatpush2.bf16.msra.mxu0 0
  %299 = vmatprep.subr.bf16.mxu0 0
  %300 = vmatpush2.bf16.msra.mxu0 0
  %301 = vmatprep.subr.bf16.mxu0 0
  %302 = vmatpush2.bf16.msra.mxu0 0
  %303 = vmatprep.subr.bf16.mxu0 0
  %304 = vmatpush2.bf16.msra.mxu0 0
  %305 = vmatprep.subr.bf16.mxu0 0
  %306 = vmatpush2.bf16.msra.mxu0 0
  %307 = vmatprep.subr.bf16.mxu0 0
  %308 = vmatpush2.bf16.msra.mxu0 0
  %309 = vmatprep.mubr.bf16.mxu0 0
  %310 = vmatmul.mubr.bf16.gmra.mxu0 %v95
  %v311 = vpop.f32.mrf.mxu0
  %v312 = vadd.f32 0.0, %v311
  %v313 = vpop.f32.mrf.mxu0
  %v314 = vpop.f32.mrf.mxu0
  %v315 = vadd.f32 0.0, %v314
  %v316 = vpop.f32.mrf.mxu0
  %317 = vdwg.mxu0
  %v318 = vmul.f32 %v312, %v201
  %v319 = vmul.f32 %v315, %v201
  %v320 = vld [vmem:[%s5] sm:$0x1]
  %v322 = vlaneseq
  %v323 = vshrl.u32 %v322, 7
  %v324 = vsub.s32 0, %v323
  %v325 = vrot.slane %v320, %v324
  %v327 = vadd.f32 %v318, %v325
  %v328 = vadd.f32 %v319, %v325
  %v329 = vxor.u32 %v211, 2147483648
  %v330 = vxor.u32 %v212, 2147483648
  %v331 = vmul.f32 %v329, 1.442695
  %v332 = vpow.pop %v331
  %v333 = vmul.f32 %v330, 1.442695
  %v334 = vpow.pop %v333
  %v335 = vadd.f32 %v332, 1.0
  %v336 = vadd.f32 %v334, 1.0
  %v337 = vrcp.pop %v335
  %v338 = vmul.f32 1.0, %v337
  %v339 = vrcp.pop %v336
  %v340 = vmul.f32 1.0, %v339
  %v341 = vmul.f32 %v211, %v338
  %v342 = vmul.f32 %v212, %v340
  %v343 = vmul.f32 %v341, %v327
  %v344 = vmul.f32 %v342, %v328
  %vm345 = vcmp.ne.f32.partialorder %v343, %v343
  %vm346 = vcmp.ne.f32.partialorder %v344, %v344
  %v347 = vsel %vm345, 0.0, %v343
  %v348 = vsel %vm346, 0.0, %v344
  %v349 = vand.u32 2147483647, %v347
  %v350 = vand.u32 2147483647, %v348
  %v351 = vmax.f32 %v349, %v350
  %352 = vmax.xlane.f32.xlu0 %v351
  %v353 = vpop.xlane.xlu0 %352
  %v354 = vrot.slane %v353, 4
  %v355 = vmax.f32 %v353, %v354
  %v356 = vrot.slane %v355, 2
  %v357 = vmax.f32 %v355, %v356
  %v358 = vrot.slane %v357, 1
  %v359 = vmax.f32 %v357, %v358
  %s360 = vtos %v359
  %p361 = scmp.eq.f32.partialorder %s360, 0.0
  %p362 = scmp.ne.f32.partialorder %s360, %s360
  %p363 = por %p361, %p362
  %v364 = vrcp.pop 127.0
  %s365 = vtos %v364
  %s366 = smul.f32 %s360, %s365
  %s367 = scalar_select %p363, 1.0, %s366
  %v368 = vstv %s367
  %v369 = vrcp.pop %v368
  %s370 = vtos %v369
  %v371 = vstv %s370
  %v372 = vmul.f32 %v347, %v371
  %v373 = vmul.f32 %v348, %v371
  %v374 = vround.ne.pseudo %v372
  %v375 = vround.ne.pseudo %v373
  %v376 = vmax.f32 %v374, -128.0
  %v377 = vmax.f32 %v375, -128.0
  %v378 = vmin.f32 %v376, 127.0
  %v379 = vmin.f32 %v377, 127.0
  %v380 = vpack.c.bf16 %v379, %v378
  %v381 = vld [vmem:[%s3] sm:$0xf]
  %v382 = vld [vmem:[%s3 + $0x4] sm:$0xf]
  %v383 = vld [vmem:[%s3 + $0x8] sm:$0xf]
  %v384 = vld [vmem:[%s3 + $0xc] sm:$0xf]
  %v385 = vld [vmem:[%s3 + $0x10] sm:$0xf]
  %v386 = vld [vmem:[%s3 + $0x14] sm:$0xf]
  %v387 = vld [vmem:[%s3 + $0x18] sm:$0xf]
  %v388 = vld [vmem:[%s3 + $0x1c] sm:$0xf]
  %v389 = vld [vmem:[%s3 + $0x20] sm:$0xf]
  %v390 = vld [vmem:[%s3 + $0x24] sm:$0xf]
  %v391 = vld [vmem:[%s3 + $0x28] sm:$0xf]
  %v392 = vld [vmem:[%s3 + $0x2c] sm:$0xf]
  %v393 = vld [vmem:[%s3 + $0x30] sm:$0xf]
  %v394 = vld [vmem:[%s3 + $0x34] sm:$0xf]
  %v395 = vld [vmem:[%s3 + $0x38] sm:$0xf]
  %v396 = vld [vmem:[%s3 + $0x3c] sm:$0xf]
  %v413 = vunpack.c.l.b16 %v381
  %v414 = vunpack.c.l.b16 %v382
  %v415 = vunpack.c.l.b16 %v383
  %v416 = vunpack.c.l.b16 %v384
  %v417 = vunpack.c.l.b16 %v385
  %v418 = vunpack.c.l.b16 %v386
  %v419 = vunpack.c.l.b16 %v387
  %v420 = vunpack.c.l.b16 %v388
  %v421 = vunpack.c.l.b16 %v389
  %v422 = vunpack.c.l.b16 %v390
  %v423 = vunpack.c.l.b16 %v391
  %v424 = vunpack.c.l.b16 %v392
  %v425 = vunpack.c.l.b16 %v393
  %v426 = vunpack.c.l.b16 %v394
  %v427 = vunpack.c.l.b16 %v395
  %v428 = vunpack.c.l.b16 %v396
  %v429 = vpack.c.b16 %v414, %v413
  %v430 = vpack.c.b16 %v416, %v415
  %v431 = vpack.c.b16 %v418, %v417
  %v432 = vpack.c.b16 %v420, %v419
  %v433 = vpack.c.b16 %v422, %v421
  %v434 = vpack.c.b16 %v424, %v423
  %v435 = vpack.c.b16 %v426, %v425
  %v436 = vpack.c.b16 %v428, %v427
  %445 = vmatprep.subr.bf16.mxu0 0
  %446 = vmatpush1.bf16.msra.mxu0 %v436
  %447 = vmatprep.subr.bf16.mxu0 0
  %448 = vmatpush1.bf16.msra.mxu0 %v435
  %449 = vmatprep.subr.bf16.mxu0 0
  %450 = vmatpush1.bf16.msra.mxu0 %v434
  %451 = vmatprep.subr.bf16.mxu0 0
  %452 = vmatpush1.bf16.msra.mxu0 %v433
  %453 = vmatprep.subr.bf16.mxu0 0
  %454 = vmatpush1.bf16.msra.mxu0 %v432
  %455 = vmatprep.subr.bf16.mxu0 0
  %456 = vmatpush1.bf16.msra.mxu0 %v431
  %457 = vmatprep.subr.bf16.mxu0 0
  %458 = vmatpush1.bf16.msra.mxu0 %v430
  %459 = vmatprep.subr.bf16.mxu0 0
  %460 = vmatpush1.bf16.msra.mxu0 %v429
  %461 = vmatprep.subr.bf16.mxu0 0
  %462 = vmatpush2.bf16.msra.mxu0 0
  %463 = vmatprep.subr.bf16.mxu0 0
  %464 = vmatpush2.bf16.msra.mxu0 0
  %465 = vmatprep.subr.bf16.mxu0 0
  %466 = vmatpush2.bf16.msra.mxu0 0
  %467 = vmatprep.subr.bf16.mxu0 0
  %468 = vmatpush2.bf16.msra.mxu0 0
  %469 = vmatprep.subr.bf16.mxu0 0
  %470 = vmatpush2.bf16.msra.mxu0 0
  %471 = vmatprep.subr.bf16.mxu0 0
  %472 = vmatpush2.bf16.msra.mxu0 0
  %473 = vmatprep.subr.bf16.mxu0 0
  %474 = vmatpush2.bf16.msra.mxu0 0
  %475 = vmatprep.subr.bf16.mxu0 0
  %476 = vmatpush2.bf16.msra.mxu0 0
  %477 = vmatprep.mubr.bf16.mxu0 0
  %478 = vmatmul.mubr.bf16.gmra.mxu0 %v380
  %v479 = vpop.f32.mrf.mxu0
  %v480 = vadd.f32 0.0, %v479
  %v481 = vpop.f32.mrf.mxu0
  %v482 = vpop.f32.mrf.mxu0
  %v483 = vadd.f32 0.0, %v482
  %v484 = vpop.f32.mrf.mxu0
  %485 = vdwg.mxu0
  %v486 = vstv %s367
  %v487 = vmul.f32 %v480, %v486
  %v488 = vmul.f32 %v483, %v486
  %v489 = vld [vmem:[%s6] sm:$0x1]
  %v491 = vlaneseq
  %v492 = vshrl.u32 %v491, 7
  %v493 = vsub.s32 0, %v492
  %v494 = vrot.slane %v489, %v493
  %v496 = vadd.f32 %v487, %v494
  %v497 = vadd.f32 %v488, %v494
  %498 = vst [vmem:[%s7] sm:$0xff] %v496
  %499 = vst [vmem:[%s7 + $0x8] sm:$0xff] %v497
  // Predicated region
  $region30: #{matmul_free_glu.1} parent=0 // pred_check
    _
  $region31: #{matmul_free_glu.1} parent=0 // pred_check_branch
    %501 = sbr.rel (0) target = $region33
  $region32: #{matmul_free_glu.1} parent=0 // pred_region
    _
  $region33: #{matmul_free_glu.1} parent=0 // pred_fallthru
    _
  // Predicated region
  $region34: #{matmul_free_glu.1} parent=0 // pred_check
    _
  $region35: #{matmul_free_glu.1} parent=0 // pred_check_branch
    %503 = sbr.rel (0) target = $region37
  $region36: #{matmul_free_glu.1} parent=0 // pred_region
    _
  $region37: #{matmul_free_glu.1} parent=0 // pred_fallthru
    _

</llo_original>
